<compile_context>
chip_gen: v5e
topology: v5e:2x2
jax: 0.10.0
libtpu: 0.0.40
codegen_flags: <defaults>
</compile_context>

<pallas_src>
import jax
import jax.numpy as jnp
import numpy as np
from jax.experimental import pallas as pl
from jax.experimental.pallas import tpu as pltpu


# -----------------------------------------------------------------------------
# Init-time glue: FFT "audio compression" of the weight matrix (numpy, runs once
# — mirrors FFTAudioCompressionEngine.compress_weight_matrix).
# -----------------------------------------------------------------------------
def fft_audio_compress_weight(weight,
                              compression_ratio: float = 0.3,
                              energy_threshold: float = 0.01,
                              window_size: int = 2048) -> jnp.ndarray:
    w = np.asarray(weight, dtype=np.float32)
    original_shape = w.shape

    # weight_to_audio_signal
    signal = w.reshape(-1).astype(np.float32)
    norm = float(np.max(np.abs(signal)))
    if norm > 0:
        signal = signal / norm
    else:
        norm = 1.0

    # spectral_analysis
    ws = min(window_size, signal.size)
    if ws < 32:
        ws = 32
    n = signal.size
    padded_len = ((n + ws - 1) // ws) * ws
    if padded_len > n:
        signal_p = np.concatenate([signal, np.zeros(padded_len - n, np.float32)])
    else:
        signal_p = signal
    windows = signal_p.reshape(-1, ws)
    spectrogram = np.fft.fft(windows.astype(np.complex64), axis=1)

    # audio_feature_detection
    magnitude = np.abs(spectrogram)
    energy = magnitude ** 2
    freq_energy = energy.mean(axis=0)      # (ws,)
    time_energy = energy.mean(axis=1)      # (num_windows,)
    freq_mask = freq_energy > (energy_threshold * freq_energy.max())
    time_mask = time_energy > (energy_threshold * time_energy.max())

    # frequency_domain_compression
    def shrink_mask(mask, energies):
        count = int(mask.sum())
        target = max(1, int(count * (1.0 - compression_ratio)))
        if target < count:
            top_idx = np.argsort(-energies)[:target]
            new_mask = np.zeros_like(mask)
            new_mask[top_idx] = True
            return new_mask
        return mask

    new_freq_mask = shrink_mask(freq_mask, freq_energy)
    new_time_mask = shrink_mask(time_mask, time_energy)
    keep = new_time_mask[:, None] & new_freq_mask[None, :]
    compressed_spec = np.where(keep, spectrogram, 0.0).astype(np.complex64)

    # spectral_reconstruction
    recon_windows = np.real(np.fft.ifft(compressed_spec, axis=1)).astype(np.float32)
    recon = recon_windows.reshape(-1)
    if recon.size > n:
        recon = recon[:n]
    elif recon.size < n:
        recon = np.concatenate([recon, np.zeros(n - recon.size, np.float32)])

    # audio_signal_to_weight
    restored = recon * norm
    total = int(np.prod(original_shape))
    if restored.size < total:
        restored = np.concatenate([restored, np.zeros(total - restored.size, np.float32)])
    elif restored.size > total:
        restored = restored[:total]
    compressed_weight = restored.reshape(original_shape).astype(np.float32)
    return jnp.asarray(compressed_weight)


# -----------------------------------------------------------------------------
# Pallas kernel: tiled y = x @ W^T + bias, accumulating directly into the
# resident output block (reduction axis k is the innermost, "arbitrary" axis).
# -----------------------------------------------------------------------------
def _linear_bias_kernel(x_ref, wt_ref, b_ref, o_ref):
    k = pl.program_id(2)

    @pl.when(k == 0)
    def _():
        # Seed the f32 accumulator (the output block itself) with the bias.
        o_ref[...] = jnp.broadcast_to(b_ref[...], o_ref.shape).astype(o_ref.dtype)

    o_ref[...] += jnp.dot(x_ref[...], wt_ref[...],
                          preferred_element_type=jnp.float32)


def _round_up(x: int, m: int) -> int:
    return ((x + m - 1) // m) * m


@jax.jit
def audio_compressed_linear(x, wt, bias):
    """x: (B, K); wt: (K, N) = compressed_weight.T (pre-transposed at init);
    bias: (N,). Returns (B, N) = x @ wt + bias."""
    B, K = x.shape
    K2, N = wt.shape
    assert K2 == K, "weight / input feature mismatch"

    # Adaptive, MXU-aligned tiles (all shapes are static at trace time).
    if B >= 128:
        tm = min(_round_up(B, 128), 256)
    else:
        tm = _round_up(B, 8)           # tiny batch: don't waste rows on padding
    tn = min(_round_up(N, 128), 512)   # lane-dense, unmasked stores
    tk = min(_round_up(K, 128), 512)   # small K collapses the reduction grid

    Bp, Np, Kp = _round_up(B, tm), _round_up(N, tn), _round_up(K, tk)

    # Zero-pad so every block is full; zero K-padding adds nothing to the sum.
    xp = x if (Bp == B and Kp == K) else jnp.pad(x, ((0, Bp - B), (0, Kp - K)))
    wtp = wt if (Kp == K and Np == N) else jnp.pad(wt, ((0, Kp - K), (0, Np - N)))
    bp = bias if Np == N else jnp.pad(bias, (0, Np - N))
    b2 = bp.reshape(1, Np).astype(jnp.float32)

    grid = (Bp // tm, Np // tn, Kp // tk)

    out = pl.pallas_call(
        _linear_bias_kernel,
        out_shape=jax.ShapeDtypeStruct((Bp, Np), jnp.float32),
        grid_spec=pltpu.PrefetchScalarGridSpec(
            num_scalar_prefetch=0,
            grid=grid,
            in_specs=[
                pl.BlockSpec((tm, tk), lambda i, j, k: (i, k)),
                pl.BlockSpec((tk, tn), lambda i, j, k: (k, j)),
                pl.BlockSpec((1, tn), lambda i, j, k: (0, j)),
            ],
            out_specs=pl.BlockSpec((tm, tn), lambda i, j, k: (i, j)),
        ),
        compiler_params=pltpu.CompilerParams(
            dimension_semantics=("parallel", "parallel", "arbitrary")),
    )(xp, wtp, b2)

    if Bp != B or Np != N:
        out = out[:B, :N]
    return out.astype(x.dtype)


# -----------------------------------------------------------------------------
# Demo / correctness check
# -----------------------------------------------------------------------------
if __name__ == "__main__":
    key = jax.random.PRNGKey(0)
    k_x, k_w, k_b = jax.random.split(key, 3)

    batch = 8
    in_features = 256
    out_features = 128

    x = jax.random.normal(k_x, (batch, in_features), dtype=jnp.float32)
    original_weight = jax.random.normal(
        k_w, (out_features, in_features), dtype=jnp.float32) * 0.05
    bias = jax.random.normal(k_b, (out_features,), dtype=jnp.float32) * 0.01

    # __init__-time FFT audio compression of the weights (plain numpy glue).
    compressed_weight = fft_audio_compress_weight(original_weight,
                                                  compression_ratio=0.3)
    assert compressed_weight.shape == original_weight.shape

    # Hoist the (out, in) -> (in, out) transpose out of the hot path: done once
    # at init, so each forward pays no HBM relayout for the static weights.
    wt = jnp.asarray(compressed_weight).T            # (in_features, out_features)
    wt = jax.device_put(wt)

    # forward: F.linear(x, compressed_weight, bias) via Pallas kernel
    out = audio_compressed_linear(x, wt, bias)
    out = jax.block_until_ready(out)

    # reference in plain JAX
    ref = x @ compressed_weight.T + bias[None, :]
    np.testing.assert_allclose(np.asarray(out), np.asarray(ref),
                               rtol=1e-5, atol=1e-5)

    print("KERNEL_OK")
</pallas_src>

<mosaic_0001>
module attributes {stable_mosaic.version = 11 : i64} {
  func.func @_linear_bias_kernel(%arg0: i32, %arg1: i32, %arg2: i32, %arg3: memref<8x256xf32, #tpu.memory_space<vmem>>, %arg4: memref<256x128xf32, #tpu.memory_space<vmem>>, %arg5: memref<1x128xf32, #tpu.memory_space<vmem>>, %arg6: memref<8x128xf32, #tpu.memory_space<vmem>>) attributes {dimension_semantics = [#tpu.dimension_semantics<parallel>, #tpu.dimension_semantics<parallel>, #tpu.dimension_semantics<arbitrary>], iteration_bounds = array<i64: 1, 1, 1>, scalar_prefetch = 0 : i64, scratch_operands = 0 : i64, tpu.core_type = #tpu.core_type<tc>, window_params = [{transform_indices = @transform_0, window_bounds = array<i64: 8, 256>}, {transform_indices = @transform_1, window_bounds = array<i64: 256, 128>}, {transform_indices = @transform_2, window_bounds = array<i64: 1, 128>}, {transform_indices = @transform_3, window_bounds = array<i64: 8, 128>}]} {
    %c0_i32 = arith.constant 0 : i32
    %0 = arith.cmpi eq, %arg2, %c0_i32 : i32
    %1 = arith.extui %0 : i1 to i32
    %c0_i32_0 = arith.constant 0 : i32
    %2 = arith.cmpi ne, %1, %c0_i32_0 : i32
    scf.if %2 {
      %c0_8 = arith.constant 0 : index
      %c0_9 = arith.constant 0 : index
      %9 = vector.load %arg5[%c0_8, %c0_9] : memref<1x128xf32, #tpu.memory_space<vmem>>, vector<1x128xf32>
      %10 = vector.shape_cast %9 : vector<1x128xf32> to vector<1x128xf32>
      %11 = vector.broadcast %10 : vector<1x128xf32> to vector<8x128xf32>
      %c0_10 = arith.constant 0 : index
      %c0_11 = arith.constant 0 : index
      %12 = vector.load %arg6[%c0_10, %c0_11] : memref<8x128xf32, #tpu.memory_space<vmem>>, vector<8x128xf32>
      tpu.vector_store %arg6[%c0_10, %c0_11], %11 {strides = array<i32>} : memref<8x128xf32, #tpu.memory_space<vmem>>, vector<8x128xf32>,
    } else {
    }
    %c0 = arith.constant 0 : index
    %c0_1 = arith.constant 0 : index
    %3 = vector.load %arg6[%c0, %c0_1] : memref<8x128xf32, #tpu.memory_space<vmem>>, vector<8x128xf32>
    %c0_2 = arith.constant 0 : index
    %c0_3 = arith.constant 0 : index
    %4 = vector.load %arg3[%c0_2, %c0_3] : memref<8x256xf32, #tpu.memory_space<vmem>>, vector<8x256xf32>
    %c0_4 = arith.constant 0 : index
    %c0_5 = arith.constant 0 : index
    %5 = vector.load %arg4[%c0_4, %c0_5] : memref<256x128xf32, #tpu.memory_space<vmem>>, vector<256x128xf32>
    %cst = arith.constant dense<0.000000e+00> : vector<8x128xf32>
    %6 = tpu.matmul %4, %5, %cst {dimension_numbers = #tpu.dot_dimension_numbers<[1], [0], [0], [1], [0, 0, 1, 1], [], []>} : vector<8x256xf32>, vector<256x128xf32>, vector<8x128xf32> -> vector<8x128xf32>
    %7 = arith.addf %3, %6 : vector<8x128xf32>
    %c0_6 = arith.constant 0 : index
    %c0_7 = arith.constant 0 : index
    %8 = vector.load %arg6[%c0_6, %c0_7] : memref<8x128xf32, #tpu.memory_space<vmem>>, vector<8x128xf32>
    tpu.vector_store %arg6[%c0_6, %c0_7], %7 {strides = array<i32>} : memref<8x128xf32, #tpu.memory_space<vmem>>, vector<8x128xf32>,
    return
  }
  func.func @transform_0(%arg0: i32, %arg1: i32, %arg2: i32) -> (i32, i32) {
    %c0_i32 = arith.constant 0 : i32
    return %arg0, %arg2 : i32, i32
  }
  func.func @transform_1(%arg0: i32, %arg1: i32, %arg2: i32) -> (i32, i32) {
    %c0_i32 = arith.constant 0 : i32
    return %arg2, %arg1 : i32, i32
  }
  func.func @transform_2(%arg0: i32, %arg1: i32, %arg2: i32) -> (i32, i32) {
    %c0_i32 = arith.constant 0 : i32
    %c0_i32_0 = arith.constant 0 : i32
    return %c0_i32, %arg1 : i32, i32
  }
  func.func @transform_3(%arg0: i32, %arg1: i32, %arg2: i32) -> (i32, i32) {
    %c0_i32 = arith.constant 0 : i32
    return %arg0, %arg1 : i32, i32
  }
}

</mosaic_0001>

<llo_original>
// kernel: audio_compressed_linear.1
$region0: #{audio_compressed_linear.1}
  #allocation0 [shape = 'u32[]', space=smem, size = 0x4, offset = 0x4, fixed_abs, tag = 'smem constant byte address 0x4 - core index']
  #allocation1 [shape = 'u32[72,128]{1,0:T(1,128)}', space=vmem, size = 0x9000, scoped, tag = 'internal scratch']
  %s0 = inlined_call_operand.hbm [shape: f32[8,256], index: 0, kind: input, shape index: {}]
  %s1 = inlined_call_operand.hbm [shape: f32[256,128], index: 1, kind: input, shape index: {}]
  %s2 = inlined_call_operand.vmem [shape: f32[1,128], index: 2, kind: input, shape index: {}]
  %s3 = inlined_call_operand.hbm [shape: f32[8,128], index: 3, kind: output, shape index: {}]
  %s4 = sld [smem:[#allocation0]]
  $region34: #{audio_compressed_linear.1} parent=0
    _
  %s6 = ssub.s32 1, %s4
  %s7 = scalar_select 0, %s6, %s4
  $region1: #{audio_compressed_linear.1} parent=0
    #allocation2 [shape = 'u8[8192]{0}', space=vmem, size = 0x2000, scoped, tag = 'input window, operand 0, single buffered']
    #allocation3 [shape = 's32[1]{0}', space=sflag, size = 0x4, scoped, tag = 'scoped memory for audio_compressed_linear.1']
    #allocation4 [shape = 's32[1]{0}', space=sflag, size = 0x4, scoped, tag = 'scoped memory for audio_compressed_linear.1']
    #allocation5 [shape = 'u8[131072]{0}', space=vmem, size = 0x20000, scoped, tag = 'input window, operand 1, single buffered']
    #allocation6 [shape = 's32[1]{0}', space=sflag, size = 0x4, scoped, tag = 'scoped memory for audio_compressed_linear.1']
    #allocation7 [shape = 'u8[4096]{0}', space=vmem, size = 0x1000, scoped, tag = 'output window, operand 0, single buffered']
    %8 = vsyncpa [#allocation3], 0
    %9 = vsyncpa [#allocation6], 0
    %10 = vsyncpa [#allocation4], 0
    // Predicated region
    $region2: #{audio_compressed_linear.1} parent=1 // pred_check
      _
    $region3: #{audio_compressed_linear.1} parent=1 // pred_check_branch
      %12 = sbr.rel (0) target = $region5
    $region4: #{audio_compressed_linear.1} parent=1 // pred_region
      %14 = vsyncadd [#allocation3], 0
      %s16 = sshll.u32 %s0, 4
      %s17 = int_to_ptr.hbm [resolvable:$true] %s16
      %s18 = sshll.u32 [#allocation2], 4
      %s19 = int_to_ptr.vmem [resolvable:$true] %s18
      %21 = dma.hbm_to_vmem [thread:$0]  %s17, 256, %s19, [#allocation3]
    $region5: #{audio_compressed_linear.1} parent=1 // pred_fallthru
      _
    // Predicated region
    $region6: #{audio_compressed_linear.1} parent=1 // pred_check
      _
    $region7: #{audio_compressed_linear.1} parent=1 // pred_check_branch
      %23 = sbr.rel (0) target = $region9
    $region8: #{audio_compressed_linear.1} parent=1 // pred_region
      %25 = vsyncadd [#allocation6], 0
      %s26 = sshll.u32 %s1, 4
      %s27 = int_to_ptr.hbm [resolvable:$true] %s26
      %s28 = sshll.u32 [#allocation5], 4
      %s29 = int_to_ptr.vmem [resolvable:$true] %s28
      %34 = dma.hbm_to_vmem [thread:$0]  %s27, 4096, %s29, [#allocation6], 128, 128, 8
    $region9: #{audio_compressed_linear.1} parent=1 // pred_fallthru
      _
    // Predicated region
    $region10: #{audio_compressed_linear.1} parent=1 // pred_check
      _
    $region11: #{audio_compressed_linear.1} parent=1 // pred_check_branch
      %36 = sbr.rel (0) target = $region13
    $region12: #{audio_compressed_linear.1} parent=1 // pred_region
      _
    $region13: #{audio_compressed_linear.1} parent=1 // pred_fallthru
      _
    // Predicated region
    $region14: #{audio_compressed_linear.1} parent=1 // pred_check
      _
    $region15: #{audio_compressed_linear.1} parent=1 // pred_check_branch
      %38 = sbr.rel (0) target = $region17
    $region16: #{audio_compressed_linear.1} parent=1 // pred_region
      %40 = dma.done [#allocation3], 256
    $region17: #{audio_compressed_linear.1} parent=1 // pred_fallthru
      _
    // Predicated region
    $region18: #{audio_compressed_linear.1} parent=1 // pred_check
      _
    $region19: #{audio_compressed_linear.1} parent=1 // pred_check_branch
      %42 = sbr.rel (0) target = $region21
    $region20: #{audio_compressed_linear.1} parent=1 // pred_region
      %44 = dma.done [#allocation6], 4096
    $region21: #{audio_compressed_linear.1} parent=1 // pred_fallthru
      _
    %p45 = scmp.eq.s32.totalorder 0, 0
    // Predicated region
    $region22: #{audio_compressed_linear.1} parent=1 // pred_check
      %p46 = pneg %p45
    $region23: #{audio_compressed_linear.1} parent=1 // pred_check_branch
      %48 = sbr.rel (%p46) target = $region25
    $region24: #{audio_compressed_linear.1} parent=1 // pred_region
      %v49 = vld [vmem:[%s2] sm:$0x1]
      %v51 = vperm.slane %v49, 0
      %53 = vst [vmem:[#allocation7] sm:$0xff] %v51
    $region25: #{audio_compressed_linear.1} parent=1 // pred_fallthru
      _
    %v54 = vld [vmem:[#allocation7] sm:$0xff]
    %v55 = vld [vmem:[#allocation2] sm:$0xff]
    %v56 = vld [vmem:[#allocation2 + $0x8] sm:$0xff]
    %v57 = vld [vmem:[#allocation5] sm:$0xff]
    %v58 = vld [vmem:[#allocation5 + $0x8] sm:$0xff]
    %v59 = vld [vmem:[#allocation5 + $0x10] sm:$0xff]
    %v60 = vld [vmem:[#allocation5 + $0x18] sm:$0xff]
    %v61 = vld [vmem:[#allocation5 + $0x20] sm:$0xff]
    %v62 = vld [vmem:[#allocation5 + $0x28] sm:$0xff]
    %v63 = vld [vmem:[#allocation5 + $0x30] sm:$0xff]
    %v64 = vld [vmem:[#allocation5 + $0x38] sm:$0xff]
    %v65 = vld [vmem:[#allocation5 + $0x40] sm:$0xff]
    %v66 = vld [vmem:[#allocation5 + $0x48] sm:$0xff]
    %v67 = vld [vmem:[#allocation5 + $0x50] sm:$0xff]
    %v68 = vld [vmem:[#allocation5 + $0x58] sm:$0xff]
    %v69 = vld [vmem:[#allocation5 + $0x60] sm:$0xff]
    %v70 = vld [vmem:[#allocation5 + $0x68] sm:$0xff]
    %v71 = vld [vmem:[#allocation5 + $0x70] sm:$0xff]
    %v72 = vld [vmem:[#allocation5 + $0x78] sm:$0xff]
    %v73 = vld [vmem:[#allocation5 + $0x80] sm:$0xff]
    %v74 = vld [vmem:[#allocation5 + $0x88] sm:$0xff]
    %v75 = vld [vmem:[#allocation5 + $0x90] sm:$0xff]
    %v76 = vld [vmem:[#allocation5 + $0x98] sm:$0xff]
    %v77 = vld [vmem:[#allocation5 + $0xa0] sm:$0xff]
    %v78 = vld [vmem:[#allocation5 + $0xa8] sm:$0xff]
    %v79 = vld [vmem:[#allocation5 + $0xb0] sm:$0xff]
    %v80 = vld [vmem:[#allocation5 + $0xb8] sm:$0xff]
    %v81 = vld [vmem:[#allocation5 + $0xc0] sm:$0xff]
    %v82 = vld [vmem:[#allocation5 + $0xc8] sm:$0xff]
    %v83 = vld [vmem:[#allocation5 + $0xd0] sm:$0xff]
    %v84 = vld [vmem:[#allocation5 + $0xd8] sm:$0xff]
    %v85 = vld [vmem:[#allocation5 + $0xe0] sm:$0xff]
    %v86 = vld [vmem:[#allocation5 + $0xe8] sm:$0xff]
    %v87 = vld [vmem:[#allocation5 + $0xf0] sm:$0xff]
    %v88 = vld [vmem:[#allocation5 + $0xf8] sm:$0xff]
    %89 = vmatpush.msra.mxu0 %v72
    %90 = vmatpush.msra.mxu0 %v71
    %91 = vmatpush.msra.mxu0 %v70
    %92 = vmatpush.msra.mxu0 %v69
    %93 = vmatpush.msra.mxu0 %v68
    %94 = vmatpush.msra.mxu0 %v67
    %95 = vmatpush.msra.mxu0 %v66
    %96 = vmatpush.msra.mxu0 %v65
    %97 = vmatpush.msra.mxu0 %v64
    %98 = vmatpush.msra.mxu0 %v63
    %99 = vmatpush.msra.mxu0 %v62
    %100 = vmatpush.msra.mxu0 %v61
    %101 = vmatpush.msra.mxu0 %v60
    %102 = vmatpush.msra.mxu0 %v59
    %103 = vmatpush.msra.mxu0 %v58
    %104 = vmatpush.msra.mxu0 %v57
    %105 = vmatmul.f32.gmra.mxu0 %v55
    %v106 = vpop.f32.mrf.mxu0
    %v107 = vadd.f32 0.0, %v106
    %108 = vdwg.mxu0
    %109 = vmatpush.msra.mxu0 %v88
    %110 = vmatpush.msra.mxu0 %v87
    %111 = vmatpush.msra.mxu0 %v86
    %112 = vmatpush.msra.mxu0 %v85
    %113 = vmatpush.msra.mxu0 %v84
    %114 = vmatpush.msra.mxu0 %v83
    %115 = vmatpush.msra.mxu0 %v82
    %116 = vmatpush.msra.mxu0 %v81
    %117 = vmatpush.msra.mxu0 %v80
    %118 = vmatpush.msra.mxu0 %v79
    %119 = vmatpush.msra.mxu0 %v78
    %120 = vmatpush.msra.mxu0 %v77
    %121 = vmatpush.msra.mxu0 %v76
    %122 = vmatpush.msra.mxu0 %v75
    %123 = vmatpush.msra.mxu0 %v74
    %124 = vmatpush.msra.mxu0 %v73
    %125 = vmatmul.f32.gmra.mxu0 %v56
    %v126 = vpop.f32.mrf.mxu0
    %v127 = vadd.f32 %v107, %v126
    %128 = vdwg.mxu0
    %v129 = vadd.f32 %v54, %v127
    %130 = vst [vmem:[#allocation7] sm:$0xff] %v129
    // Predicated region
    $region26: #{audio_compressed_linear.1} parent=1 // pred_check
      _
    $region27: #{audio_compressed_linear.1} parent=1 // pred_check_branch
      %132 = sbr.rel (0) target = $region29
    $region28: #{audio_compressed_linear.1} parent=1 // pred_region
      %134 = vsyncadd [#allocation4], 0
      %s136 = sshll.u32 [#allocation7], 4
      %s137 = int_to_ptr.vmem [resolvable:$true] %s136
      %s138 = sshll.u32 %s3, 4
      %s139 = int_to_ptr.hbm [resolvable:$true] %s138
      %141 = dma.vmem_to_hbm [thread:$0]  %s137, 128, %s139, [#allocation4]
    $region29: #{audio_compressed_linear.1} parent=1 // pred_fallthru
      _
    // Predicated region
    $region30: #{audio_compressed_linear.1} parent=1 // pred_check
      _
    $region31: #{audio_compressed_linear.1} parent=1 // pred_check_branch
      %143 = sbr.rel (0) target = $region33
    $region32: #{audio_compressed_linear.1} parent=1 // pred_region
      %145 = dma.done [#allocation4], 128
    $region33: #{audio_compressed_linear.1} parent=1 // pred_fallthru
      _
    %146 = vsyncpa [#allocation3], 1
    %147 = vsyncpa [#allocation6], 1
    %148 = vsyncpa [#allocation4], 1

</llo_original>
